<compile_context>
chip_gen: v7x
topology: tpu7x:2x2x1
jax: 0.10.0
libtpu: 0.0.40
codegen_flags: <defaults>
</compile_context>

<pallas_src>
import jax
import jax.numpy as jnp
from jax.experimental import pallas as pl
from jax.experimental.pallas import tpu as pltpu

NOISE_STD = 0.01
NONZERO_EPS = 1e-4
LANE = 128
MAX_ROW_TILE = 512
TILE_BYTE_BUDGET = 1 << 20  # ~1 MiB per array per tile -> safe on v7x scoped VMEM


def _round_up(n, m):
    return ((n + m - 1) // m) * m


def _solar_noise_kernel(x_ref, noise_ref, ch_ref, o_ref):
    x = x_ref[...]                                   # [TB, LW] f32
    ch = ch_ref[...] > 0.5                           # [1, LW] bool, broadcasts over rows

    # "nonzero" solar readings: those not within eps of the sentinel value -1.0.
    nonzero = (jnp.abs(x + 1.0) > NONZERO_EPS).astype(x.dtype)

    # noise_ref already carries the noise_std * channel-mask scaling (wrapper),
    # so it is exactly zero on non-solar lanes.
    y_solar = jnp.clip(x + noise_ref[...] * nonzero, -1.0, 1.0)

    # Single fused select: solar channels -> clamped/noised, others -> passthrough.
    o_ref[...] = jnp.where(ch, y_solar, x)


def solar_random_noise_augment(x, solar_indices, *, noise_std=NOISE_STD, key=None):
    """x: [B, F] float32. solar_indices: tuple of channel indices (or None)."""
    if solar_indices is None:
        return x
    if key is None:
        key = jax.random.PRNGKey(0)

    B, F = x.shape
    orig_dtype = x.dtype
    x = x.astype(jnp.float32)

    # Dense per-channel {0,1} mask (glue, plain JAX).
    chmask = jnp.zeros((F,), dtype=jnp.float32)
    chmask = chmask.at[jnp.array(solar_indices, dtype=jnp.int32)].set(1.0)

    # ---- lane-dense repacking ------------------------------------------------
    if F % LANE == 0:
        lw, rows = F, B
        x2 = x
        ch_row = chmask[None, :]
        mode = "full"
    elif LANE % F == 0:
        reps = LANE // F
        pad_b = (-B) % reps
        xp = jnp.pad(x, ((0, pad_b), (0, 0)))
        rows = (B + pad_b) // reps
        lw = LANE
        x2 = xp.reshape(rows, lw)
        ch_row = jnp.tile(chmask, reps)[None, :]
        mode = "packed"
    else:
        pad_f = (-F) % LANE
        lw, rows = F + pad_f, B
        x2 = jnp.pad(x, ((0, 0), (0, pad_f)))
        ch_row = jnp.pad(chmask, (0, pad_f))[None, :]
        mode = "padded"

    # ---- row tiling ------------------------------------------------------------
    tb = min(MAX_ROW_TILE, _round_up(rows, 8))
    max_tb = max(8, (TILE_BYTE_BUDGET // (lw * 4)) // 8 * 8)
    tb = max(8, min(tb, max_tb))
    rows_pad = _round_up(rows, tb)
    if rows_pad != rows:
        x2 = jnp.pad(x2, ((0, rows_pad - rows), (0, 0)))
    grid = (rows_pad // tb,)

    # Pre-scaled Gaussian noise (scale fuses into the RNG op at the XLA level):
    # zero on non-solar lanes, N(0, noise_std) on solar lanes.
    noise = jax.random.normal(key, (rows_pad, lw), dtype=jnp.float32) * (noise_std * ch_row)

    out2 = pl.pallas_call(
        _solar_noise_kernel,
        out_shape=jax.ShapeDtypeStruct((rows_pad, lw), jnp.float32),
        grid=grid,
        in_specs=[
            pl.BlockSpec((tb, lw), lambda i: (i, 0)),   # x tile
            pl.BlockSpec((tb, lw), lambda i: (i, 0)),   # pre-scaled noise tile
            pl.BlockSpec((1, lw), lambda i: (0, 0)),    # channel mask (resident)
        ],
        out_specs=pl.BlockSpec((tb, lw), lambda i: (i, 0)),
        input_output_aliases={0: 0},                    # reuse x's HBM buffer
        compiler_params=pltpu.CompilerParams(
            dimension_semantics=("parallel",)),
    )(x2, noise, ch_row)

    # ---- undo the packing / padding --------------------------------------------
    if mode == "full":
        out = out2[:B]
    elif mode == "packed":
        out = out2[:rows].reshape(-1, F)[:B]
    else:  # padded
        out = out2[:B, :F]
    return out.astype(orig_dtype)


if __name__ == "__main__":
    key = jax.random.PRNGKey(0)
    B, F = 4, 32
    solar_indices = (3, 5, 11, 17, 30)

    # Deterministic example input in [-1, 1]; force a few sentinel (-1.0) values
    # on solar channels to exercise the "nonzero" masking path.
    k_in, k_noise = jax.random.split(key)
    x = jax.random.uniform(k_in, (B, F), dtype=jnp.float32, minval=-1.0, maxval=1.0)
    x = x.at[0, 3].set(-1.0)
    x = x.at[2, 11].set(-1.0)

    out = solar_random_noise_augment(x, solar_indices, key=k_noise)
    out = jax.block_until_ready(out)

    # Sanity checks (not a correctness assert against torch RNG, which differs):
    non_solar = jnp.array([c for c in range(F) if c not in solar_indices])
    assert out.shape == x.shape
    # non-solar channels unchanged
    assert bool(jnp.all(out[:, non_solar] == x[:, non_solar]))
    # sentinel (-1.0) solar readings unchanged
    assert bool(out[0, 3] == -1.0) and bool(out[2, 11] == -1.0)
    # solar channels clamped to [-1, 1]
    sol = out[:, jnp.array(solar_indices)]
    assert bool(jnp.all(sol >= -1.0)) and bool(jnp.all(sol <= 1.0))

    print("KERNEL_OK")
</pallas_src>

<mosaic_0001>
module attributes {stable_mosaic.version = 11 : i64} {
  func.func @_solar_noise_kernel(%arg0: i32, %arg1: memref<8x128xf32, #tpu.memory_space<vmem>>, %arg2: memref<8x128xf32, #tpu.memory_space<vmem>>, %arg3: memref<1x128xf32, #tpu.memory_space<vmem>>, %arg4: memref<8x128xf32, #tpu.memory_space<vmem>>) attributes {dimension_semantics = [#tpu.dimension_semantics<parallel>], iteration_bounds = array<i64: 1>, scalar_prefetch = 0 : i64, scratch_operands = 0 : i64, tpu.core_type = #tpu.core_type<tc>, window_params = [{transform_indices = @transform_0, window_bounds = array<i64: 8, 128>}, {transform_indices = @transform_1, window_bounds = array<i64: 8, 128>}, {pipeline_mode = #tpu.pipeline_mode<synchronous>, transform_indices = @transform_2, window_bounds = array<i64: 1, 128>}, {transform_indices = @transform_3, window_bounds = array<i64: 8, 128>}]} {
    %c0 = arith.constant 0 : index
    %c0_0 = arith.constant 0 : index
    %0 = vector.load %arg1[%c0, %c0_0] : memref<8x128xf32, #tpu.memory_space<vmem>>, vector<8x128xf32>
    %c0_1 = arith.constant 0 : index
    %c0_2 = arith.constant 0 : index
    %1 = vector.load %arg3[%c0_1, %c0_2] : memref<1x128xf32, #tpu.memory_space<vmem>>, vector<1x128xf32>
    %cst = arith.constant 5.000000e-01 : f32
    %2 = vector.broadcast %cst : f32 to vector<1x128xf32>
    %3 = arith.cmpf ogt, %1, %2 : vector<1x128xf32>
    %cst_3 = arith.constant 1.000000e+00 : f32
    %4 = vector.broadcast %cst_3 : f32 to vector<8x128xf32>
    %5 = arith.addf %0, %4 : vector<8x128xf32>
    %6 = math.absf %5 : vector<8x128xf32>
    %cst_4 = arith.constant 9.99999974E-5 : f32
    %7 = vector.broadcast %cst_4 : f32 to vector<8x128xf32>
    %8 = arith.cmpf ogt, %6, %7 : vector<8x128xf32>
    %9 = arith.extui %8 : vector<8x128xi1> to vector<8x128xi32>
    %10 = arith.sitofp %9 : vector<8x128xi32> to vector<8x128xf32>
    %c0_5 = arith.constant 0 : index
    %c0_6 = arith.constant 0 : index
    %11 = vector.load %arg2[%c0_5, %c0_6] : memref<8x128xf32, #tpu.memory_space<vmem>>, vector<8x128xf32>
    %12 = arith.mulf %11, %10 : vector<8x128xf32>
    %13 = arith.addf %0, %12 : vector<8x128xf32>
    %cst_7 = arith.constant -1.000000e+00 : f32
    %cst_8 = arith.constant 1.000000e+00 : f32
    %14 = vector.broadcast %cst_7 : f32 to vector<8x128xf32>
    %15 = arith.maximumf %14, %13 : vector<8x128xf32>
    %16 = vector.broadcast %cst_8 : f32 to vector<8x128xf32>
    %17 = arith.minimumf %16, %15 : vector<8x128xf32>
    %18 = vector.shape_cast %3 : vector<1x128xi1> to vector<1x128xi1>
    %19 = vector.broadcast %18 : vector<1x128xi1> to vector<8x128xi1>
    %20 = arith.select %19, %17, %0 : vector<8x128xi1>, vector<8x128xf32>
    %c0_9 = arith.constant 0 : index
    %c0_10 = arith.constant 0 : index
    %21 = vector.load %arg4[%c0_9, %c0_10] : memref<8x128xf32, #tpu.memory_space<vmem>>, vector<8x128xf32>
    tpu.vector_store %arg4[%c0_9, %c0_10], %20 {strides = array<i32>} : memref<8x128xf32, #tpu.memory_space<vmem>>, vector<8x128xf32>,
    return
  }
  func.func @transform_0(%arg0: i32) -> (i32, i32) {
    %c0_i32 = arith.constant 0 : i32
    %c0_i32_0 = arith.constant 0 : i32
    return %arg0, %c0_i32 : i32, i32
  }
  func.func @transform_1(%arg0: i32) -> (i32, i32) {
    %c0_i32 = arith.constant 0 : i32
    %c0_i32_0 = arith.constant 0 : i32
    return %arg0, %c0_i32 : i32, i32
  }
  func.func @transform_2(%arg0: i32) -> (i32, i32) {
    %c0_i32 = arith.constant 0 : i32
    %c0_i32_0 = arith.constant 0 : i32
    %c0_i32_1 = arith.constant 0 : i32
    return %c0_i32, %c0_i32_0 : i32, i32
  }
  func.func @transform_3(%arg0: i32) -> (i32, i32) {
    %c0_i32 = arith.constant 0 : i32
    %c0_i32_0 = arith.constant 0 : i32
    return %arg0, %c0_i32 : i32, i32
  }
}

</mosaic_0001>

<llo_original>
// kernel: tpu_custom_call.1
$region0: #{tpu_custom_call.1}
  #allocation0 [shape = 'u32[]', space=smem, size = 0x4, offset = 0x4, fixed_abs, tag = 'smem constant byte address 0x4 - core index']
  #allocation1 [shape = 'u32[144,128]{1,0:T(1,128)}', space=vmem, size = 0x12000, scoped, tag = 'internal scratch']
  %s0 = inlined_call_operand.hbm [shape: f32[8,128], index: 0, kind: input, shape index: {}, may-alias: {0,3}]
  %s1 = inlined_call_operand.vmem [shape: f32[8,128], index: 1, kind: input, shape index: {}]
  %s2 = inlined_call_operand.vmem [shape: f32[1,128], index: 2, kind: input, shape index: {}]
  %s3 = inlined_call_operand.hbm [shape: f32[8,128], index: 3, kind: output, shape index: {}, may-alias: {0,3}]
  %s4 = sld [smem:[#allocation0]]
  $region26: #{tpu_custom_call.1} parent=0
    _
  %s6 = ssub.s32 1, %s4
  %s7 = scalar_select 0, %s6, %s4
  $region1: #{tpu_custom_call.1} parent=0
    #allocation2 [shape = 'u8[4096]{0}', space=vmem, size = 0x1000, scoped, tag = 'input window, operand 0, single buffered']
    #allocation3 [shape = 's32[1]{0}', space=sflag, size = 0x4, scoped, tag = 'scoped memory for tpu_custom_call.1']
    #allocation4 [shape = 's32[1]{0}', space=sflag, size = 0x4, scoped, tag = 'scoped memory for tpu_custom_call.1']
    #allocation5 [shape = 'u8[4096]{0}', space=vmem, size = 0x1000, scoped, tag = 'output window, operand 0, single buffered']
    %8 = vsyncpa [#allocation3], 0
    %9 = vsyncpa [#allocation4], 0
    // Predicated region
    $region2: #{tpu_custom_call.1} parent=1 // pred_check
      _
    $region3: #{tpu_custom_call.1} parent=1 // pred_check_branch
      %11 = sbr.rel (0) target = $region5
    $region4: #{tpu_custom_call.1} parent=1 // pred_region
      %s13 = ssub.s32 128, 128
      %14 = vsyncadd [#allocation3], %s13
      %s16 = sshll.u32 [#allocation2], 4
      %s17 = int_to_ptr.vmem [resolvable:$true] %s16
      %19 = dma.hbm_to_vmem [thread:$0]  %s0, 128, %s17, [#allocation3]
    $region5: #{tpu_custom_call.1} parent=1 // pred_fallthru
      _
    // Predicated region
    $region6: #{tpu_custom_call.1} parent=1 // pred_check
      _
    $region7: #{tpu_custom_call.1} parent=1 // pred_check_branch
      %21 = sbr.rel (0) target = $region9
    $region8: #{tpu_custom_call.1} parent=1 // pred_region
      _
    $region9: #{tpu_custom_call.1} parent=1 // pred_fallthru
      _
    // Predicated region
    $region10: #{tpu_custom_call.1} parent=1 // pred_check
      _
    $region11: #{tpu_custom_call.1} parent=1 // pred_check_branch
      %23 = sbr.rel (0) target = $region13
    $region12: #{tpu_custom_call.1} parent=1 // pred_region
      _
    $region13: #{tpu_custom_call.1} parent=1 // pred_fallthru
      _
    // Predicated region
    $region14: #{tpu_custom_call.1} parent=1 // pred_check
      _
    $region15: #{tpu_custom_call.1} parent=1 // pred_check_branch
      %25 = sbr.rel (0) target = $region17
    $region16: #{tpu_custom_call.1} parent=1 // pred_region
      %26 = dma.done [#allocation3], 128
    $region17: #{tpu_custom_call.1} parent=1 // pred_fallthru
      _
    %v27 = vld [vmem:[#allocation2] sm:$0xff]
    %v28 = vld [vmem:[%s2] sm:$0x1]
    %vm29 = vcmp.gt.f32.partialorder %v28, 0.5
    %v30 = vadd.f32 %v27, 1.0
    %v31 = vand.u32 2147483647, %v30
    %vm32 = vcmp.gt.f32.partialorder %v31, 0.0001
    %v33 = vsel %vm32, 1, 0
    %v34 = vcvt.s32.f32 %v33
    %v35 = vld [vmem:[%s1] sm:$0xff]
    %v36 = vmul.f32 %v35, %v34
    %v37 = vadd.f32 %v27, %v36
    %v38 = vmax.f32 %v37, -1.0
    %v39 = vmin.f32 %v38, 1.0
    %v40 = vsel %vm29, 1, 0
    %v41 = vlaneseq
    %v42 = vshrl.u32 %v41, 7
    %v43 = vsub.s32 0, %v42
    %v44 = vrot.slane %v40, %v43
    %vm45 = vcmp.eq.s32.totalorder %v44, 1
    %v46 = vsel %vm45, %v39, %v27
    %47 = vst [vmem:[#allocation5] sm:$0xff] %v46
    // Predicated region
    $region18: #{tpu_custom_call.1} parent=1 // pred_check
      _
    $region19: #{tpu_custom_call.1} parent=1 // pred_check_branch
      %49 = sbr.rel (0) target = $region21
    $region20: #{tpu_custom_call.1} parent=1 // pred_region
      %s51 = ssub.s32 128, 128
      %52 = vsyncadd [#allocation4], %s51
      %s54 = sshll.u32 [#allocation5], 4
      %s55 = int_to_ptr.vmem [resolvable:$true] %s54
      %57 = dma.vmem_to_hbm [thread:$0]  %s55, 128, %s3, [#allocation4]
    $region21: #{tpu_custom_call.1} parent=1 // pred_fallthru
      _
    // Predicated region
    $region22: #{tpu_custom_call.1} parent=1 // pred_check
      _
    $region23: #{tpu_custom_call.1} parent=1 // pred_check_branch
      %59 = sbr.rel (0) target = $region25
    $region24: #{tpu_custom_call.1} parent=1 // pred_region
      %60 = dma.done [#allocation4], 128
    $region25: #{tpu_custom_call.1} parent=1 // pred_fallthru
      _
    %61 = vsyncpa [#allocation3], 1
    %62 = vsyncpa [#allocation4], 1

</llo_original>
